<compile_context>
chip_gen: v7x
topology: tpu7x:2x2x1
jax: 0.10.0
libtpu: 0.0.40
codegen_flags: <defaults>
</compile_context>

<pallas_src>
import functools

import jax
import jax.numpy as jnp
from jax.experimental import pallas as pl
from jax.experimental.pallas import tpu as pltpu

_VMEM_LIMIT = 48 << 20  # safe on v5e/v6e/v7x; non-binding for these tile sizes


# --------------------------------------------------------------------------------------
# Phase 1: Bh = h @ Wb + bb  (bf16 output feeds the MXU aggregation)
# --------------------------------------------------------------------------------------
def _proj_kernel(h_ref, wb_ref, bb_ref, bh_ref):
    h = h_ref[...].astype(jnp.bfloat16)
    bh = jnp.dot(h, wb_ref[...], preferred_element_type=jnp.float32) + bb_ref[...]
    bh_ref[...] = bh.astype(bh_ref.dtype)


# --------------------------------------------------------------------------------------
# Phase 2: h_pre = (h @ Wa + ba) + adj^T @ Bh  (tiled, accumulated in the output block)
#          + per-row-tile BatchNorm partial sums.
# --------------------------------------------------------------------------------------
def _agg_kernel(h_ref, bh_ref, adj_ref, wa_ref, ba_ref, hpre_ref, psum_ref, psq_ref):
    k = pl.program_id(1)

    @pl.when(k == 0)
    def _():
        # Fused Ah projection seeds the accumulator (output block is VMEM-resident
        # across the k axis -> acts as the f32 accumulator).
        h_blk = h_ref[...].astype(jnp.bfloat16)
        hpre_ref[...] = jnp.dot(h_blk, wa_ref[...],
                                preferred_element_type=jnp.float32) + ba_ref[...]

    # sum_h[v, :] += sum_{u in k-tile} adj[u, v] * Bh[u, :]
    # Contracting adj dim 0 folds the transpose into the MXU (no wrapper adj.T pass).
    adj_blk = adj_ref[...].astype(jnp.bfloat16)  # 0/1 mask -> exact in bf16
    hpre_ref[...] += jax.lax.dot_general(
        adj_blk, bh_ref[...],
        dimension_numbers=(((0,), (0,)), ((), ())),
        preferred_element_type=jnp.float32)

    @pl.when(k == pl.num_programs(1) - 1)
    def _():
        # Per-row-tile BN partials (sum, sum of squares); finalized in phase 3.
        h_pre = hpre_ref[...]
        psum_ref[...] = jnp.sum(h_pre, axis=0, keepdims=True)[None]
        psq_ref[...] = jnp.sum(h_pre * h_pre, axis=0, keepdims=True)[None]


# --------------------------------------------------------------------------------------
# Phase 3: finalize BN stats + normalize + ReLU + residual (tiled, megacore-parallel)
# --------------------------------------------------------------------------------------
def _finalize_kernel(*refs, n_nodes, batch_norm, residual, eps=1e-5):
    if residual:
        h_ref, hpre_ref, psum_ref, psq_ref, gamma_ref, beta_ref, out_ref = refs
    else:
        hpre_ref, psum_ref, psq_ref, gamma_ref, beta_ref, out_ref = refs
        h_ref = None

    h_new = hpre_ref[...]
    if batch_norm:
        # TODO(synk): training-mode batch stats only (biased var, eps=1e-5); no
        # running-mean/var tracking or eval-mode path, matching the original kernel.
        inv_n = jnp.float32(1.0 / n_nodes)
        mean = jnp.sum(psum_ref[...], axis=0) * inv_n                   # (1, dout)
        var = jnp.sum(psq_ref[...], axis=0) * inv_n - mean * mean
        var = jnp.maximum(var, 0.0)
        scale = gamma_ref[...] * jax.lax.rsqrt(var + eps)
        shift = beta_ref[...] - mean * scale
        h_new = h_new * scale + shift

    h_new = jnp.maximum(h_new, 0.0)                                      # ReLU
    if residual:
        h_new = h_ref[...].astype(jnp.float32) + h_new

    # TODO(synk): F.dropout is identity here (p=0.0 / eval); no stochastic dropout.
    out_ref[...] = h_new.astype(out_ref.dtype)


def _tile(n, cap):
    # Largest power-of-two tile <= cap dividing n; minimum 16 (bf16 native sublane tile).
    for t in (512, 256, 128, 64, 32, 16):
        if t <= cap and t <= n and n % t == 0:
            return t
    return n


def gated_gcn_isotropic_layer(h, adj, params, *, batch_norm=True, residual=False):
    """New node features h' on TPU. adj[u, v] = 1.0 iff directed edge u -> v (0/1 mask)."""
    N, din = h.shape
    dout = params["wa"].shape[1]
    do_residual = bool(residual) and (din == dout)  # mirrors the PyTorch constructor

    wa = params["wa"].astype(jnp.bfloat16)
    wb = params["wb"].astype(jnp.bfloat16)
    ba = params["ba"].astype(jnp.float32).reshape(1, -1)
    bb = params["bb"].astype(jnp.float32).reshape(1, -1)
    gamma = jnp.asarray(params.get("gamma", jnp.ones((1, dout))), jnp.float32).reshape(1, -1)
    beta = jnp.asarray(params.get("beta", jnp.zeros((1, dout))), jnp.float32).reshape(1, -1)

    tn = _tile(N, 256)   # phase-1 row tile
    tm = _tile(N, 256)   # phase-2/3 dest-node row tile
    tk = _tile(N, 512)   # phase-2 source-node (reduction) tile

    # ---- Phase 1: Bh projection ------------------------------------------------------
    bh = pl.pallas_call(
        _proj_kernel,
        out_shape=jax.ShapeDtypeStruct((N, dout), jnp.bfloat16),
        grid=(N // tn,),
        in_specs=[pl.BlockSpec((tn, din), lambda i: (i, 0)),
                  pl.BlockSpec((din, dout), lambda i: (0, 0)),
                  pl.BlockSpec((1, dout), lambda i: (0, 0))],
        out_specs=pl.BlockSpec((tn, dout), lambda i: (i, 0)),
        compiler_params=pltpu.CompilerParams(
            dimension_semantics=("parallel",),
            vmem_limit_bytes=_VMEM_LIMIT),
    )(h, wb, bb)

    n_row = N // tm
    n_k = N // tk

    # ---- Phase 2: aggregation (adj^T @ Bh, fused Ah) + BN partials ---------------------
    hpre, psum, psq = pl.pallas_call(
        _agg_kernel,
        out_shape=(jax.ShapeDtypeStruct((N, dout), jnp.float32),
                   jax.ShapeDtypeStruct((n_row, 1, dout), jnp.float32),
                   jax.ShapeDtypeStruct((n_row, 1, dout), jnp.float32)),
        grid=(n_row, n_k),
        in_specs=[pl.BlockSpec((tm, din), lambda i, k: (i, 0)),
                  pl.BlockSpec((tk, dout), lambda i, k: (k, 0)),
                  pl.BlockSpec((tk, tm), lambda i, k: (k, i)),
                  pl.BlockSpec((din, dout), lambda i, k: (0, 0)),
                  pl.BlockSpec((1, dout), lambda i, k: (0, 0))],
        out_specs=[pl.BlockSpec((tm, dout), lambda i, k: (i, 0)),
                   pl.BlockSpec((1, 1, dout), lambda i, k: (i, 0, 0)),
                   pl.BlockSpec((1, 1, dout), lambda i, k: (i, 0, 0))],
        compiler_params=pltpu.CompilerParams(
            dimension_semantics=("parallel", "arbitrary"),
            vmem_limit_bytes=_VMEM_LIMIT),
    )(h, bh, adj, wa, ba)

    # ---- Phase 3: finalize BN + ReLU + residual ----------------------------------------
    kernel3 = functools.partial(_finalize_kernel, n_nodes=N,
                                batch_norm=bool(batch_norm), residual=do_residual)
    args3, in_specs3 = [], []
    if do_residual:
        args3.append(h)
        in_specs3.append(pl.BlockSpec((tm, din), lambda i: (i, 0)))
    args3 += [hpre, psum, psq, gamma, beta]
    in_specs3 += [pl.BlockSpec((tm, dout), lambda i: (i, 0)),
                  pl.BlockSpec((n_row, 1, dout), lambda i: (0, 0, 0)),
                  pl.BlockSpec((n_row, 1, dout), lambda i: (0, 0, 0)),
                  pl.BlockSpec((1, dout), lambda i: (0, 0)),
                  pl.BlockSpec((1, dout), lambda i: (0, 0))]

    out = pl.pallas_call(
        kernel3,
        out_shape=jax.ShapeDtypeStruct((N, dout), h.dtype),
        grid=(n_row,),
        in_specs=in_specs3,
        out_specs=pl.BlockSpec((tm, dout), lambda i: (i, 0)),
        compiler_params=pltpu.CompilerParams(
            dimension_semantics=("parallel",),
            vmem_limit_bytes=_VMEM_LIMIT),
    )(*args3)
    return out


def gated_gcn_isotropic_forward(h, e, adj, params, *, batch_norm=True, residual=False):
    """Equivalent of GatedGCNLayerIsotropic.forward(g, h, e) -> (h, e)."""
    h_out = gated_gcn_isotropic_layer(h, adj, params,
                                      batch_norm=batch_norm, residual=residual)
    return h_out, e  # the module returns the input e unchanged


def _reference(h, adj, params, *, batch_norm, residual):
    """Plain-JAX f32 reference of the module forward (training-mode BN)."""
    ah = h @ params["wa"] + params["ba"]
    bh = h @ params["wb"] + params["bb"]
    x = ah + adj.T @ bh
    if batch_norm:
        mean = jnp.mean(x, axis=0, keepdims=True)
        var = jnp.mean((x - mean) ** 2, axis=0, keepdims=True)
        x = (x - mean) * jax.lax.rsqrt(var + 1e-5)
        x = x * params["gamma"] + params["beta"]
    x = jnp.maximum(x, 0.0)
    if residual and h.shape[1] == x.shape[1]:
        x = h + x
    return x


if __name__ == "__main__":
    N, D = 768, 128  # nodes, hidden dim (input_dim == output_dim) -> exercises row & k tiling

    key = jax.random.PRNGKey(0)
    k_h, k_e, kw0, kw1, kb0, kb1 = jax.random.split(key, 6)

    h = jax.random.normal(k_h, (N, D), dtype=jnp.float32)

    # Deterministic directed graph: edges u -> (u+1) % N and u -> (u+3) % N.
    src = jnp.concatenate([jnp.arange(N), jnp.arange(N)])
    dst = jnp.concatenate([(jnp.arange(N) + 1) % N, (jnp.arange(N) + 3) % N])
    adj = jnp.zeros((N, N), jnp.float32).at[src, dst].set(1.0)  # 0/1 mask (exact in bf16)

    n_edges = int(src.shape[0])
    e = jax.random.normal(k_e, (n_edges, D), dtype=jnp.float32)  # passed through unchanged

    # Deterministic parameter init (PyTorch nn.Linear-style uniform(-1/sqrt(fan_in), +)).
    s = 1.0 / float(D) ** 0.5
    params = dict(
        wa=jax.random.uniform(kw0, (D, D), jnp.float32, -s, s),
        wb=jax.random.uniform(kw1, (D, D), jnp.float32, -s, s),
        ba=jax.random.uniform(kb0, (1, D), jnp.float32, -s, s),
        bb=jax.random.uniform(kb1, (1, D), jnp.float32, -s, s),
        gamma=jnp.ones((1, D), jnp.float32),
        beta=jnp.zeros((1, D), jnp.float32),
    )

    h_out, e_out = gated_gcn_isotropic_forward(h, e, adj, params,
                                               batch_norm=True, residual=True)
    jax.block_until_ready((h_out, e_out))

    assert h_out.shape == (N, D) and e_out.shape == (n_edges, D)
    ref = _reference(h, adj, params, batch_norm=True, residual=True)
    err = float(jnp.max(jnp.abs(h_out.astype(jnp.float32) - ref)))
    assert err < 0.25, f"max abs err vs f32 reference too large: {err}"  # bf16 MXU drift only
    print("KERNEL_OK")
</pallas_src>

<mosaic_0001>
module attributes {stable_mosaic.version = 11 : i64} {
  func.func @_proj_kernel(%arg0: i32, %arg1: memref<256x128xf32, #tpu.memory_space<vmem>>, %arg2: memref<128x128xbf16, #tpu.memory_space<vmem>>, %arg3: memref<1x128xf32, #tpu.memory_space<vmem>>, %arg4: memref<256x128xbf16, #tpu.memory_space<vmem>>) attributes {dimension_semantics = [#tpu.dimension_semantics<parallel>], iteration_bounds = array<i64: 3>, scalar_prefetch = 0 : i64, scratch_operands = 0 : i64, tpu.core_type = #tpu.core_type<tc>, window_params = [{transform_indices = @transform_0, window_bounds = array<i64: 256, 128>}, {pipeline_mode = #tpu.pipeline_mode<synchronous>, transform_indices = @transform_1, window_bounds = array<i64: 128, 128>}, {pipeline_mode = #tpu.pipeline_mode<synchronous>, transform_indices = @transform_2, window_bounds = array<i64: 1, 128>}, {transform_indices = @transform_3, window_bounds = array<i64: 256, 128>}]} {
    %c0 = arith.constant 0 : index
    %c0_0 = arith.constant 0 : index
    %0 = vector.load %arg1[%c0, %c0_0] : memref<256x128xf32, #tpu.memory_space<vmem>>, vector<256x128xf32>
    %1 = arith.truncf %0 : vector<256x128xf32> to vector<256x128xbf16>
    %c0_1 = arith.constant 0 : index
    %c0_2 = arith.constant 0 : index
    %2 = vector.load %arg2[%c0_1, %c0_2] : memref<128x128xbf16, #tpu.memory_space<vmem>>, vector<128x128xbf16>
    %cst = arith.constant dense<0.000000e+00> : vector<256x128xf32>
    %3 = tpu.matmul %1, %2, %cst {dimension_numbers = #tpu.dot_dimension_numbers<[1], [0], [0], [1], [0, 0, 1, 1], [], []>} : vector<256x128xbf16>, vector<128x128xbf16>, vector<256x128xf32> -> vector<256x128xf32>
    %c0_3 = arith.constant 0 : index
    %c0_4 = arith.constant 0 : index
    %4 = vector.load %arg3[%c0_3, %c0_4] : memref<1x128xf32, #tpu.memory_space<vmem>>, vector<1x128xf32>
    %5 = vector.broadcast %4 : vector<1x128xf32> to vector<256x128xf32>
    %6 = arith.addf %3, %5 : vector<256x128xf32>
    %7 = arith.truncf %6 : vector<256x128xf32> to vector<256x128xbf16>
    %c0_5 = arith.constant 0 : index
    %c0_6 = arith.constant 0 : index
    %8 = vector.load %arg4[%c0_5, %c0_6] : memref<256x128xbf16, #tpu.memory_space<vmem>>, vector<256x128xbf16>
    tpu.vector_store %arg4[%c0_5, %c0_6], %7 {strides = array<i32>} : memref<256x128xbf16, #tpu.memory_space<vmem>>, vector<256x128xbf16>,
    return
  }
  func.func @transform_0(%arg0: i32) -> (i32, i32) {
    %c0_i32 = arith.constant 0 : i32
    %c0_i32_0 = arith.constant 0 : i32
    return %arg0, %c0_i32 : i32, i32
  }
  func.func @transform_1(%arg0: i32) -> (i32, i32) {
    %c0_i32 = arith.constant 0 : i32
    %c0_i32_0 = arith.constant 0 : i32
    %c0_i32_1 = arith.constant 0 : i32
    return %c0_i32, %c0_i32_0 : i32, i32
  }
  func.func @transform_2(%arg0: i32) -> (i32, i32) {
    %c0_i32 = arith.constant 0 : i32
    %c0_i32_0 = arith.constant 0 : i32
    %c0_i32_1 = arith.constant 0 : i32
    return %c0_i32, %c0_i32_0 : i32, i32
  }
  func.func @transform_3(%arg0: i32) -> (i32, i32) {
    %c0_i32 = arith.constant 0 : i32
    %c0_i32_0 = arith.constant 0 : i32
    return %arg0, %c0_i32 : i32, i32
  }
}

</mosaic_0001>

<llo_original>
// kernel: tpu_custom_call.1
$region0: #{tpu_custom_call.1}
  #allocation0 [shape = 'u32[]', space=smem, size = 0x4, offset = 0x4, fixed_abs, tag = 'smem constant byte address 0x4 - core index']
  #allocation1 [shape = 'u32[144,128]{1,0:T(1,128)}', space=vmem, size = 0x12000, scoped, tag = 'internal scratch']
  %s0 = inlined_call_operand.hbm [shape: f32[768,128], index: 0, kind: input, shape index: {}]
  %s1 = inlined_call_operand.hbm [shape: bf16[128,128], index: 1, kind: input, shape index: {}]
  %s2 = inlined_call_operand.vmem [shape: f32[1,128], index: 2, kind: input, shape index: {}]
  %s3 = inlined_call_operand.hbm [shape: bf16[768,128], index: 3, kind: output, shape index: {}]
  %s4 = sld [smem:[#allocation0]]
  $region53: #{tpu_custom_call.1} parent=0
    _
  %s6 = ssub.s32 1, %s4
  %s7 = scalar_select 0, %s6, %s4
  $region1: #{tpu_custom_call.1} parent=0
    #allocation2 [shape = 'u8[262144]{0}', space=vmem, size = 0x40000, scoped, tag = 'input window, operand 0']
    #allocation3 [shape = 's32[2]{0}', space=sflag, size = 0x8, scoped, tag = 'scoped memory for tpu_custom_call.1']
    #allocation4 [shape = 's32[2]{0}', space=sflag, size = 0x8, scoped, tag = 'scoped memory for tpu_custom_call.1']
    #allocation5 [shape = 'u8[32768]{0}', space=vmem, size = 0x8000, scoped, tag = 'input window, operand 1, single buffered']
    #allocation6 [shape = 's32[1]{0}', space=sflag, size = 0x4, scoped, tag = 'scoped memory for tpu_custom_call.1']
    #allocation7 [shape = 'u8[131072]{0}', space=vmem, size = 0x20000, scoped, tag = 'output window, operand 0']
    %8 = vsyncpa [#allocation3], 0
    %s9 = scalar_lea.sflag [#allocation3], 1
    %10 = vsyncpa %s9, 0
    %11 = vsyncpa [#allocation6], 0
    %12 = vsyncpa [#allocation4], 0
    %s13 = scalar_lea.sflag [#allocation4], 1
    %14 = vsyncpa %s13, 0
    loop: start=0, step=1, limit=5
    $region2: #{tpu_custom_call.1} parent=1 // loop_pre_header
      _
    $region3: #{tpu_custom_call.1} parent=1 // loop_header
      %s16 = sphi 0, %s20
      %p17 = scmp.ge.s32.totalorder %s16, 5
      %s26 = sphi 0, %s28
      %s29 = sphi 0, %s26
      %s30 = sphi 0, %s29
      %s46 = sphi 0, %s30
      %s50 = sphi 0, %s50
      %s52 = sphi 0, %s50
      %s53 = sphi 0, %s52
      %s67 = sphi 0, %s53
      %s71 = sphi 0, %s71
      %s73 = sphi 0, %s71
      %s74 = sphi 0, %s73
      %s88 = sphi 0, %s74
      %s94 = sphi 0, %s96
      %s97 = sphi 0, %s94
      %s98 = sphi 0, %s97
      %s114 = sphi 0, %s98
    $region4: #{tpu_custom_call.1} parent=1 // loop_header_branch
      %19 = sbr.rel (%p17) target = $region8
    $region5: #{tpu_custom_call.1} parent=1 // loop_body
      %s21 = ssub.s32 %s16, 1
      %s22 = ssub.s32 %s16, 2
      %s23 = sadd.s32 %s16, 1
      %s24 = ssub.s32 %s16, %s23
      %p25 = scmp.eq.s32.totalorder %s24, 0
      %s27 = sadd.s32 %s26, 1
      %s28 = scalar_select %p25, %s26, %s27
      %p31 = pneg %p25
      %p32 = scmp.eq.s32.totalorder %s16, 2
      %p33 = por %p31, %p32
      %p34 = scmp.ne.s32.totalorder %s26, %s29
      %p35 = scmp.eq.s32.totalorder %s16, 0
      %p36 = por %p34, %p35
      %p37 = scmp.ne.s32.totalorder %s26, %s29
      %p38 = scmp.eq.s32.totalorder %s21, 2
      %p39 = por %p37, %p38
      %p40 = scmp.ne.s32.totalorder %s29, %s30
      %p41 = scmp.eq.s32.totalorder %s21, 0
      %p42 = por %p40, %p41
      %p43 = scmp.ne.s32.totalorder %s29, %s30
      %p44 = scmp.eq.s32.totalorder %s22, 2
      %p45 = por %p43, %p44
      %p47 = scmp.ne.s32.totalorder %s30, %s46
      %p48 = scmp.eq.s32.totalorder %s22, 0
      %p49 = por %p47, %p48
      %s51 = sadd.s32 %s50, 1
      %p54 = scmp.eq.s32.totalorder %s16, 2
      %p55 = scmp.ne.s32.totalorder %s50, %s52
      %p56 = scmp.eq.s32.totalorder %s16, 0
      %p57 = por %p55, %p56
      %p58 = scmp.ne.s32.totalorder %s50, %s52
      %p59 = scmp.eq.s32.totalorder %s21, 2
      %p60 = por %p58, %p59
      %p61 = scmp.ne.s32.totalorder %s52, %s53
      %p62 = scmp.eq.s32.totalorder %s21, 0
      %p63 = por %p61, %p62
      %p64 = scmp.ne.s32.totalorder %s52, %s53
      %p65 = scmp.eq.s32.totalorder %s22, 2
      %p66 = por %p64, %p65
      %p68 = scmp.ne.s32.totalorder %s53, %s67
      %p69 = scmp.eq.s32.totalorder %s22, 0
      %p70 = por %p68, %p69
      %s72 = sadd.s32 %s71, 1
      %p75 = scmp.eq.s32.totalorder %s16, 2
      %p76 = scmp.ne.s32.totalorder %s71, %s73
      %p77 = scmp.eq.s32.totalorder %s16, 0
      %p78 = por %p76, %p77
      %p79 = scmp.ne.s32.totalorder %s71, %s73
      %p80 = scmp.eq.s32.totalorder %s21, 2
      %p81 = por %p79, %p80
      %p82 = scmp.ne.s32.totalorder %s73, %s74
      %p83 = scmp.eq.s32.totalorder %s21, 0
      %p84 = por %p82, %p83
      %p85 = scmp.ne.s32.totalorder %s73, %s74
      %p86 = scmp.eq.s32.totalorder %s22, 2
      %p87 = por %p85, %p86
      %p89 = scmp.ne.s32.totalorder %s74, %s88
      %p90 = scmp.eq.s32.totalorder %s22, 0
      %p91 = por %p89, %p90
      %s92 = ssub.s32 %s16, %s23
      %p93 = scmp.eq.s32.totalorder %s92, 0
      %s95 = sadd.s32 %s94, 1
      %s96 = scalar_select %p93, %s94, %s95
      %p99 = pneg %p93
      %p100 = scmp.eq.s32.totalorder %s16, 2
      %p101 = por %p99, %p100
      %p102 = scmp.ne.s32.totalorder %s94, %s97
      %p103 = scmp.eq.s32.totalorder %s16, 0
      %p104 = por %p102, %p103
      %p105 = scmp.ne.s32.totalorder %s94, %s97
      %p106 = scmp.eq.s32.totalorder %s21, 2
      %p107 = por %p105, %p106
      %p108 = scmp.ne.s32.totalorder %s97, %s98
      %p109 = scmp.eq.s32.totalorder %s21, 0
      %p110 = por %p108, %p109
      %p111 = scmp.ne.s32.totalorder %s97, %s98
      %p112 = scmp.eq.s32.totalorder %s22, 2
      %p113 = por %p111, %p112
      %p115 = scmp.ne.s32.totalorder %s98, %s114
      %p116 = scmp.eq.s32.totalorder %s22, 0
      %p117 = por %p115, %p116
      %p118 = scmp.le.s32.totalorder 1, %s16
      %p119 = scmp.lt.s32.totalorder %s16, 4
      %p120 = pnand %p118, %p119
      %p121 = pneg %p120
      // Predicated region
      $region9: #{tpu_custom_call.1} parent=5 // pred_check
        _
      $region10: #{tpu_custom_call.1} parent=5 // pred_check_branch
        %123 = sbr.rel (%p120) target = $region12
      $region11: #{tpu_custom_call.1} parent=5 // pred_region
        %s124 = ssub.s32 %s16, 1
        // Predicated region
        $region13: #{tpu_custom_call.1} parent=11 // pred_check
          %p125 = pneg %p63
        $region14: #{tpu_custom_call.1} parent=11 // pred_check_branch
          %127 = sbr.rel (%p125) target = $region16
        $region15: #{tpu_custom_call.1} parent=11 // pred_region
          %s129 = ssub.s32 1024, 1024
          %130 = vsyncadd [#allocation6], %s129
          %s131 = sshll.u32 [#allocation5], 4
          %s132 = int_to_ptr.vmem [resolvable:$true] %s131
          %137 = dma.hbm_to_vmem [thread:$0]  %s1, 1024, %s132, [#allocation6], 64, 64, 4
        $region16: #{tpu_custom_call.1} parent=11 // pred_fallthru
          _
        // Predicated region
        $region17: #{tpu_custom_call.1} parent=11 // pred_check
          %p138 = pneg %p84
        $region18: #{tpu_custom_call.1} parent=11 // pred_check_branch
          %140 = sbr.rel (%p138) target = $region20
        $region19: #{tpu_custom_call.1} parent=11 // pred_region
          _
        $region20: #{tpu_custom_call.1} parent=11 // pred_fallthru
          _
      $region12: #{tpu_custom_call.1} parent=5 // pred_fallthru
        _
      %p141 = scmp.lt.s32.totalorder %s16, 3
      // Predicated region
      $region21: #{tpu_custom_call.1} parent=5 // pred_check
        %p142 = pneg %p141
      $region22: #{tpu_custom_call.1} parent=5 // pred_check_branch
        %144 = sbr.rel (%p142) target = $region24
      $region23: #{tpu_custom_call.1} parent=5 // pred_region
        // Predicated region
        $region25: #{tpu_custom_call.1} parent=23 // pred_check
          %p145 = pneg %p36
        $region26: #{tpu_custom_call.1} parent=23 // pred_check_branch
          %147 = sbr.rel (%p145) target = $region28
        $region27: #{tpu_custom_call.1} parent=23 // pred_region
          %s148 = sand.u32 %s26, 1
          %s149 = scalar_lea.sflag [#allocation3], %s148
          %s150 = sand.u32 %s26, 1
          %s151 = smul.addr %s150, 256
          %s152 = scalar_lea.vmem [#allocation2], %s151
          %s153 = smul.u32 32, %s16
          %s155 = ssub.s32 4096, 4096
          %156 = vsyncadd %s149, %s155
          %s157 = smul.addr %s153, 128
          %s158 = scalar_lea.hbm %s0, %s157
          %s159 = sshll.u32 %s152, 4
          %s160 = int_to_ptr.vmem [resolvable:$true] %s159
          %165 = dma.hbm_to_vmem [thread:$0]  %s158, 4096, %s160, %s149, 128, 128, 8
        $region28: #{tpu_custom_call.1} parent=23 // pred_fallthru
          _
      $region24: #{tpu_custom_call.1} parent=5 // pred_fallthru
        _
      %p166 = scmp.le.s32.totalorder 1, %s16
      %p167 = scmp.lt.s32.totalorder %s16, 4
      %p168 = pnand %p166, %p167
      %p169 = pneg %p168
      // Predicated region
      $region29: #{tpu_custom_call.1} parent=5 // pred_check
        _
      $region30: #{tpu_custom_call.1} parent=5 // pred_check_branch
        %171 = sbr.rel (%p168) target = $region32
      $region31: #{tpu_custom_call.1} parent=5 // pred_region
        %s172 = ssub.s32 %s16, 1
        %s173 = sand.u32 %s29, 1
        %s174 = scalar_lea.sflag [#allocation3], %s173
        %s175 = sand.u32 %s29, 1
        %s176 = smul.addr %s175, 256
        %s177 = scalar_lea.vmem [#allocation2], %s176
        // Predicated region
        $region33: #{tpu_custom_call.1} parent=31 // pred_check
          %p178 = pneg %p42
        $region34: #{tpu_custom_call.1} parent=31 // pred_check_branch
          %180 = sbr.rel (%p178) target = $region36
        $region35: #{tpu_custom_call.1} parent=31 // pred_region
          %181 = dma.done %s174, 4096
        $region36: #{tpu_custom_call.1} parent=31 // pred_fallthru
          _
        // Predicated region
        $region37: #{tpu_custom_call.1} parent=31 // pred_check
          %p182 = pneg %p63
        $region38: #{tpu_custom_call.1} parent=31 // pred_check_branch
          %184 = sbr.rel (%p182) target = $region40
        $region39: #{tpu_custom_call.1} parent=31 // pred_region
          %185 = dma.done [#allocation6], 1024
        $region40: #{tpu_custom_call.1} parent=31 // pred_fallthru
          _
        %s186 = sand.u32 %s29, 1
        %s187 = scalar_lea.sflag [#allocation3], %s186
        %s188 = sand.u32 %s29, 1
        %s189 = smul.addr %s188, 256
        %s190 = scalar_lea.vmem [#allocation2], %s189
        %p191 = pneg %p42
        %p192 = pneg %p39
        %p193 = pneg %p63
        %p194 = pneg %p60
        %p195 = pneg %p84
        %p196 = pneg %p81
        %p197 = pneg %p110
        %p198 = pneg %p107
        %s199 = sand.u32 %s97, 1
        %s200 = scalar_lea.sflag [#allocation4], %s199
        %s201 = sand.u32 %s97, 1
        %s202 = smul.addr %s201, 128
        %s203 = scalar_lea.vmem [#allocation7], %s202
        %s204 = smul.u32 32, %s21
        %s205 = smul.u32 32, %s21
        %v207 = vld [vmem:[%s177] sm:$0xff]
        %v208 = vld [vmem:[%s177 + $0x8] sm:$0xff]
        %v209 = vld [vmem:[%s177 + $0x10] sm:$0xff]
        %v210 = vld [vmem:[%s177 + $0x18] sm:$0xff]
        %v211 = vld [vmem:[%s177 + $0x20] sm:$0xff]
        %v212 = vld [vmem:[%s177 + $0x28] sm:$0xff]
        %v213 = vld [vmem:[%s177 + $0x30] sm:$0xff]
        %v214 = vld [vmem:[%s177 + $0x38] sm:$0xff]
        %v215 = vld [vmem:[%s177 + $0x40] sm:$0xff]
        %v216 = vld [vmem:[%s177 + $0x48] sm:$0xff]
        %v217 = vld [vmem:[%s177 + $0x50] sm:$0xff]
        %v218 = vld [vmem:[%s177 + $0x58] sm:$0xff]
        %v219 = vld [vmem:[%s177 + $0x60] sm:$0xff]
        %v220 = vld [vmem:[%s177 + $0x68] sm:$0xff]
        %v221 = vld [vmem:[%s177 + $0x70] sm:$0xff]
        %v222 = vld [vmem:[%s177 + $0x78] sm:$0xff]
        %v223 = vld [vmem:[%s177 + $0x80] sm:$0xff]
        %v224 = vld [vmem:[%s177 + $0x88] sm:$0xff]
        %v225 = vld [vmem:[%s177 + $0x90] sm:$0xff]
        %v226 = vld [vmem:[%s177 + $0x98] sm:$0xff]
        %v227 = vld [vmem:[%s177 + $0xa0] sm:$0xff]
        %v228 = vld [vmem:[%s177 + $0xa8] sm:$0xff]
        %v229 = vld [vmem:[%s177 + $0xb0] sm:$0xff]
        %v230 = vld [vmem:[%s177 + $0xb8] sm:$0xff]
        %v231 = vld [vmem:[%s177 + $0xc0] sm:$0xff]
        %v232 = vld [vmem:[%s177 + $0xc8] sm:$0xff]
        %v233 = vld [vmem:[%s177 + $0xd0] sm:$0xff]
        %v234 = vld [vmem:[%s177 + $0xd8] sm:$0xff]
        %v235 = vld [vmem:[%s177 + $0xe0] sm:$0xff]
        %v236 = vld [vmem:[%s177 + $0xe8] sm:$0xff]
        %v237 = vld [vmem:[%s177 + $0xf0] sm:$0xff]
        %v238 = vld [vmem:[%s177 + $0xf8] sm:$0xff]
        %v239 = vpack.c.bf16 %v208, %v207
        %v240 = vpack.c.bf16 %v210, %v209
        %v241 = vpack.c.bf16 %v212, %v211
        %v242 = vpack.c.bf16 %v214, %v213
        %v243 = vpack.c.bf16 %v216, %v215
        %v244 = vpack.c.bf16 %v218, %v217
        %v245 = vpack.c.bf16 %v220, %v219
        %v246 = vpack.c.bf16 %v222, %v221
        %v247 = vpack.c.bf16 %v224, %v223
        %v248 = vpack.c.bf16 %v226, %v225
        %v249 = vpack.c.bf16 %v228, %v227
        %v250 = vpack.c.bf16 %v230, %v229
        %v251 = vpack.c.bf16 %v232, %v231
        %v252 = vpack.c.bf16 %v234, %v233
        %v253 = vpack.c.bf16 %v236, %v235
        %v254 = vpack.c.bf16 %v238, %v237
        %v255 = vld [vmem:[#allocation5] sm:$0xf]
        %v256 = vld [vmem:[#allocation5 + $0x4] sm:$0xf]
        %v257 = vld [vmem:[#allocation5 + $0x8] sm:$0xf]
        %v258 = vld [vmem:[#allocation5 + $0xc] sm:$0xf]
        %v259 = vld [vmem:[#allocation5 + $0x10] sm:$0xf]
        %v260 = vld [vmem:[#allocation5 + $0x14] sm:$0xf]
        %v261 = vld [vmem:[#allocation5 + $0x18] sm:$0xf]
        %v262 = vld [vmem:[#allocation5 + $0x1c] sm:$0xf]
        %v263 = vld [vmem:[#allocation5 + $0x20] sm:$0xf]
        %v264 = vld [vmem:[#allocation5 + $0x24] sm:$0xf]
        %v265 = vld [vmem:[#allocation5 + $0x28] sm:$0xf]
        %v266 = vld [vmem:[#allocation5 + $0x2c] sm:$0xf]
        %v267 = vld [vmem:[#allocation5 + $0x30] sm:$0xf]
        %v268 = vld [vmem:[#allocation5 + $0x34] sm:$0xf]
        %v269 = vld [vmem:[#allocation5 + $0x38] sm:$0xf]
        %v270 = vld [vmem:[#allocation5 + $0x3c] sm:$0xf]
        %v271 = vld [vmem:[%s2] sm:$0x1]
        %v273 = vlaneseq
        %v274 = vshrl.u32 %v273, 7
        %v275 = vsub.s32 0, %v274
        %v276 = vrot.slane %v271, %v275
        %v294 = vunpack.c.l.b16 %v255
        %v295 = vunpack.c.l.b16 %v256
        %v296 = vunpack.c.l.b16 %v257
        %v297 = vunpack.c.l.b16 %v258
        %v298 = vunpack.c.l.b16 %v259
        %v299 = vunpack.c.l.b16 %v260
        %v300 = vunpack.c.l.b16 %v261
        %v301 = vunpack.c.l.b16 %v262
        %v302 = vunpack.c.l.b16 %v263
        %v303 = vunpack.c.l.b16 %v264
        %v304 = vunpack.c.l.b16 %v265
        %v305 = vunpack.c.l.b16 %v266
        %v306 = vunpack.c.l.b16 %v267
        %v307 = vunpack.c.l.b16 %v268
        %v308 = vunpack.c.l.b16 %v269
        %v309 = vunpack.c.l.b16 %v270
        %v310 = vpack.c.b16 %v295, %v294
        %v311 = vpack.c.b16 %v297, %v296
        %v312 = vpack.c.b16 %v299, %v298
        %v313 = vpack.c.b16 %v301, %v300
        %v314 = vpack.c.b16 %v303, %v302
        %v315 = vpack.c.b16 %v305, %v304
        %v316 = vpack.c.b16 %v307, %v306
        %v317 = vpack.c.b16 %v309, %v308
        %326 = vmatprep.subr.bf16.mxu0 0
        %327 = vmatpush1.bf16.msra.mxu0 %v310
        %328 = vmatprep.subr.bf16.mxu0 0
        %329 = vmatpush1.bf16.msra.mxu0 %v311
        %330 = vmatprep.subr.bf16.mxu0 0
        %331 = vmatpush1.bf16.msra.mxu0 %v312
        %332 = vmatprep.subr.bf16.mxu0 0
        %333 = vmatpush1.bf16.msra.mxu0 %v313
        %334 = vmatprep.subr.bf16.mxu0 0
        %335 = vmatpush1.bf16.msra.mxu0 %v314
        %336 = vmatprep.subr.bf16.mxu0 0
        %337 = vmatpush1.bf16.msra.mxu0 %v315
        %338 = vmatprep.subr.bf16.mxu0 0
        %339 = vmatpush1.bf16.msra.mxu0 %v316
        %340 = vmatprep.subr.bf16.mxu0 0
        %341 = vmatpush1.bf16.msra.mxu0 %v317
        %342 = vmatprep.subr.bf16.mxu0 0
        %343 = vmatpush1.bf16.msra.mxu0 0
        %344 = vmatprep.subr.bf16.mxu0 0
        %345 = vmatpush1.bf16.msra.mxu0 0
        %346 = vmatprep.subr.bf16.mxu0 0
        %347 = vmatpush1.bf16.msra.mxu0 0
        %348 = vmatprep.subr.bf16.mxu0 0
        %349 = vmatpush1.bf16.msra.mxu0 0
        %350 = vmatprep.subr.bf16.mxu0 0
        %351 = vmatpush1.bf16.msra.mxu0 0
        %352 = vmatprep.subr.bf16.mxu0 0
        %353 = vmatpush1.bf16.msra.mxu0 0
        %354 = vmatprep.subr.bf16.mxu0 0
        %355 = vmatpush1.bf16.msra.mxu0 0
        %356 = vmatprep.subr.bf16.mxu0 0
        %357 = vmatpush1.bf16.msra.mxu0 0
        %358 = vmatprep.mubr.bf16.mxu0 0
        %359 = vmatmul.mubr.bf16.gmra.mrb[0].mxu0 %v239
        %v360 = vpop.f32.mrb[0].mxu0
        %v361 = vadd.f32 %v276, %v360
        %v362 = vpop.f32.mrb[0].mxu0
        %v363 = vpop.f32.mrb[0].mxu0
        %v364 = vadd.f32 %v276, %v363
        %v365 = vpop.f32.mrb[0].mxu0
        %366 = vmatprep.mubr.bf16.mxu0 0
        %367 = vmatmul.mubr.bf16.gmra.mrb[0].mxu0 %v240
        %v368 = vpop.f32.mrb[0].mxu0
        %v369 = vadd.f32 %v276, %v368
        %v370 = vpop.f32.mrb[0].mxu0
        %v371 = vpop.f32.mrb[0].mxu0
        %v372 = vadd.f32 %v276, %v371
        %v373 = vpop.f32.mrb[0].mxu0
        %374 = vmatprep.mubr.bf16.mxu0 0
        %375 = vmatmul.mubr.bf16.gmra.mrb[0].mxu0 %v241
        %v376 = vpop.f32.mrb[0].mxu0
        %v377 = vadd.f32 %v276, %v376
        %v378 = vpop.f32.mrb[0].mxu0
        %v379 = vpop.f32.mrb[0].mxu0
        %v380 = vadd.f32 %v276, %v379
        %v381 = vpop.f32.mrb[0].mxu0
        %382 = vmatprep.mubr.bf16.mxu0 0
        %383 = vmatmul.mubr.bf16.gmra.mrb[0].mxu0 %v242
        %v384 = vpop.f32.mrb[0].mxu0
        %v385 = vadd.f32 %v276, %v384
        %v386 = vpop.f32.mrb[0].mxu0
        %v387 = vpop.f32.mrb[0].mxu0
        %v388 = vadd.f32 %v276, %v387
        %v389 = vpop.f32.mrb[0].mxu0
        %390 = vmatprep.mubr.bf16.mxu0 0
        %391 = vmatmul.mubr.bf16.gmra.mrb[0].mxu0 %v243
        %v392 = vpop.f32.mrb[0].mxu0
        %v393 = vadd.f32 %v276, %v392
        %v394 = vpop.f32.mrb[0].mxu0
        %v395 = vpop.f32.mrb[0].mxu0
        %v396 = vadd.f32 %v276, %v395
        %v397 = vpop.f32.mrb[0].mxu0
        %398 = vmatprep.mubr.bf16.mxu0 0
        %399 = vmatmul.mubr.bf16.gmra.mrb[0].mxu0 %v244
        %v400 = vpop.f32.mrb[0].mxu0
        %v401 = vadd.f32 %v276, %v400
        %v402 = vpop.f32.mrb[0].mxu0
        %v403 = vpop.f32.mrb[0].mxu0
        %v404 = vadd.f32 %v276, %v403
        %v405 = vpop.f32.mrb[0].mxu0
        %406 = vmatprep.mubr.bf16.mxu0 0
        %407 = vmatmul.mubr.bf16.gmra.mrb[0].mxu0 %v245
        %v408 = vpop.f32.mrb[0].mxu0
        %v409 = vadd.f32 %v276, %v408
        %v410 = vpop.f32.mrb[0].mxu0
        %v411 = vpop.f32.mrb[0].mxu0
        %v412 = vadd.f32 %v276, %v411
        %v413 = vpop.f32.mrb[0].mxu0
        %414 = vmatprep.mubr.bf16.mxu0 0
        %415 = vmatmul.mubr.bf16.gmra.mrb[0].mxu0 %v246
        %v416 = vpop.f32.mrb[0].mxu0
        %v417 = vadd.f32 %v276, %v416
        %v418 = vpop.f32.mrb[0].mxu0
        %v419 = vpop.f32.mrb[0].mxu0
        %v420 = vadd.f32 %v276, %v419
        %v421 = vpop.f32.mrb[0].mxu0
        %422 = vmatprep.mubr.bf16.mxu0 0
        %423 = vmatmul.mubr.bf16.gmra.mrb[0].mxu0 %v247
        %v424 = vpop.f32.mrb[0].mxu0
        %v425 = vadd.f32 %v276, %v424
        %v426 = vpop.f32.mrb[0].mxu0
        %v427 = vpop.f32.mrb[0].mxu0
        %v428 = vadd.f32 %v276, %v427
        %v429 = vpop.f32.mrb[0].mxu0
        %430 = vmatprep.mubr.bf16.mxu0 0
        %431 = vmatmul.mubr.bf16.gmra.mrb[0].mxu0 %v248
        %v432 = vpop.f32.mrb[0].mxu0
        %v433 = vadd.f32 %v276, %v432
        %v434 = vpop.f32.mrb[0].mxu0
        %v435 = vpop.f32.mrb[0].mxu0
        %v436 = vadd.f32 %v276, %v435
        %v437 = vpop.f32.mrb[0].mxu0
        %438 = vmatprep.mubr.bf16.mxu0 0
        %439 = vmatmul.mubr.bf16.gmra.mrb[0].mxu0 %v249
        %v440 = vpop.f32.mrb[0].mxu0
        %v441 = vadd.f32 %v276, %v440
        %v442 = vpop.f32.mrb[0].mxu0
        %v443 = vpop.f32.mrb[0].mxu0
        %v444 = vadd.f32 %v276, %v443
        %v445 = vpop.f32.mrb[0].mxu0
        %446 = vmatprep.mubr.bf16.mxu0 0
        %447 = vmatmul.mubr.bf16.gmra.mrb[0].mxu0 %v250
        %v448 = vpop.f32.mrb[0].mxu0
        %v449 = vadd.f32 %v276, %v448
        %v450 = vpop.f32.mrb[0].mxu0
        %v451 = vpop.f32.mrb[0].mxu0
        %v452 = vadd.f32 %v276, %v451
        %v453 = vpop.f32.mrb[0].mxu0
        %454 = vmatprep.mubr.bf16.mxu0 0
        %455 = vmatmul.mubr.bf16.gmra.mrb[0].mxu0 %v251
        %v456 = vpop.f32.mrb[0].mxu0
        %v457 = vadd.f32 %v276, %v456
        %v458 = vpop.f32.mrb[0].mxu0
        %v459 = vpop.f32.mrb[0].mxu0
        %v460 = vadd.f32 %v276, %v459
        %v461 = vpop.f32.mrb[0].mxu0
        %462 = vmatprep.mubr.bf16.mxu0 0
        %463 = vmatmul.mubr.bf16.gmra.mrb[0].mxu0 %v252
        %v464 = vpop.f32.mrb[0].mxu0
        %v465 = vadd.f32 %v276, %v464
        %v466 = vpop.f32.mrb[0].mxu0
        %v467 = vpop.f32.mrb[0].mxu0
        %v468 = vadd.f32 %v276, %v467
        %v469 = vpop.f32.mrb[0].mxu0
        %470 = vmatprep.mubr.bf16.mxu0 0
        %471 = vmatmul.mubr.bf16.gmra.mrb[0].mxu0 %v253
        %v472 = vpop.f32.mrb[0].mxu0
        %v473 = vadd.f32 %v276, %v472
        %v474 = vpop.f32.mrb[0].mxu0
        %v475 = vpop.f32.mrb[0].mxu0
        %v476 = vadd.f32 %v276, %v475
        %v477 = vpop.f32.mrb[0].mxu0
        %478 = vmatprep.mubr.bf16.mxu0 0
        %479 = vmatmul.mubr.bf16.gmra.mrb[0].mxu0 %v254
        %v480 = vpop.f32.mrb[0].mxu0
        %v481 = vadd.f32 %v276, %v480
        %v482 = vpop.f32.mrb[0].mxu0
        %v483 = vpop.f32.mrb[0].mxu0
        %v484 = vadd.f32 %v276, %v483
        %v485 = vpop.f32.mrb[0].mxu0
        %486 = vdwg.mxu0
        %v487 = vpack.c.bf16 %v364, %v361
        %v488 = vpack.c.bf16 %v372, %v369
        %v489 = vpack.c.bf16 %v380, %v377
        %v490 = vpack.c.bf16 %v388, %v385
        %v491 = vpack.c.bf16 %v396, %v393
        %v492 = vpack.c.bf16 %v404, %v401
        %v493 = vpack.c.bf16 %v412, %v409
        %v494 = vpack.c.bf16 %v420, %v417
        %v495 = vpack.c.bf16 %v428, %v425
        %v496 = vpack.c.bf16 %v436, %v433
        %v497 = vpack.c.bf16 %v444, %v441
        %v498 = vpack.c.bf16 %v452, %v449
        %v499 = vpack.c.bf16 %v460, %v457
        %v500 = vpack.c.bf16 %v468, %v465
        %v501 = vpack.c.bf16 %v476, %v473
        %v502 = vpack.c.bf16 %v484, %v481
        %v519 = vunpack.c.l.b16 %v487
        %v520 = vunpack.c.h.b16 %v487
        %v521 = vunpack.c.l.b16 %v488
        %v522 = vunpack.c.h.b16 %v488
        %v523 = vunpack.c.l.b16 %v489
        %v524 = vunpack.c.h.b16 %v489
        %v525 = vunpack.c.l.b16 %v490
        %v526 = vunpack.c.h.b16 %v490
        %v527 = vunpack.c.l.b16 %v491
        %v528 = vunpack.c.h.b16 %v491
        %v529 = vunpack.c.l.b16 %v492
        %v530 = vunpack.c.h.b16 %v492
        %v531 = vunpack.c.l.b16 %v493
        %v532 = vunpack.c.h.b16 %v493
        %v533 = vunpack.c.l.b16 %v494
        %v534 = vunpack.c.h.b16 %v494
        %v535 = vunpack.c.l.b16 %v495
        %v536 = vunpack.c.h.b16 %v495
        %v537 = vunpack.c.l.b16 %v496
        %v538 = vunpack.c.h.b16 %v496
        %v539 = vunpack.c.l.b16 %v497
        %v540 = vunpack.c.h.b16 %v497
        %v541 = vunpack.c.l.b16 %v498
        %v542 = vunpack.c.h.b16 %v498
        %v543 = vunpack.c.l.b16 %v499
        %v544 = vunpack.c.h.b16 %v499
        %v545 = vunpack.c.l.b16 %v500
        %v546 = vunpack.c.h.b16 %v500
        %v547 = vunpack.c.l.b16 %v501
        %v548 = vunpack.c.h.b16 %v501
        %v549 = vunpack.c.l.b16 %v502
        %v550 = vunpack.c.h.b16 %v502
        %v551 = vpack.c.b16 %v519, %v519
        %v552 = vpack.c.b16 %v520, %v520
        %v553 = vpack.c.b16 %v521, %v521
        %v554 = vpack.c.b16 %v522, %v522
        %v555 = vpack.c.b16 %v523, %v523
        %v556 = vpack.c.b16 %v524, %v524
        %v557 = vpack.c.b16 %v525, %v525
        %v558 = vpack.c.b16 %v526, %v526
        %v559 = vpack.c.b16 %v527, %v527
        %v560 = vpack.c.b16 %v528, %v528
        %v561 = vpack.c.b16 %v529, %v529
        %v562 = vpack.c.b16 %v530, %v530
        %v563 = vpack.c.b16 %v531, %v531
        %v564 = vpack.c.b16 %v532, %v532
        %v565 = vpack.c.b16 %v533, %v533
        %v566 = vpack.c.b16 %v534, %v534
        %v567 = vpack.c.b16 %v535, %v535
        %v568 = vpack.c.b16 %v536, %v536
        %v569 = vpack.c.b16 %v537, %v537
        %v570 = vpack.c.b16 %v538, %v538
        %v571 = vpack.c.b16 %v539, %v539
        %v572 = vpack.c.b16 %v540, %v540
        %v573 = vpack.c.b16 %v541, %v541
        %v574 = vpack.c.b16 %v542, %v542
        %v575 = vpack.c.b16 %v543, %v543
        %v576 = vpack.c.b16 %v544, %v544
        %v577 = vpack.c.b16 %v545, %v545
        %v578 = vpack.c.b16 %v546, %v546
        %v579 = vpack.c.b16 %v547, %v547
        %v580 = vpack.c.b16 %v548, %v548
        %v581 = vpack.c.b16 %v549, %v549
        %v582 = vpack.c.b16 %v550, %v550
        %615 = vst [vmem:[%s203] sm:$0xf] %v551
        %616 = vst [vmem:[%s203 + $0x4] sm:$0xf] %v552
        %617 = vst [vmem:[%s203 + $0x8] sm:$0xf] %v553
        %618 = vst [vmem:[%s203 + $0xc] sm:$0xf] %v554
        %619 = vst [vmem:[%s203 + $0x10] sm:$0xf] %v555
        %620 = vst [vmem:[%s203 + $0x14] sm:$0xf] %v556
        %621 = vst [vmem:[%s203 + $0x18] sm:$0xf] %v557
        %622 = vst [vmem:[%s203 + $0x1c] sm:$0xf] %v558
        %623 = vst [vmem:[%s203 + $0x20] sm:$0xf] %v559
        %624 = vst [vmem:[%s203 + $0x24] sm:$0xf] %v560
        %625 = vst [vmem:[%s203 + $0x28] sm:$0xf] %v561
        %626 = vst [vmem:[%s203 + $0x2c] sm:$0xf] %v562
        %627 = vst [vmem:[%s203 + $0x30] sm:$0xf] %v563
        %628 = vst [vmem:[%s203 + $0x34] sm:$0xf] %v564
        %629 = vst [vmem:[%s203 + $0x38] sm:$0xf] %v565
        %630 = vst [vmem:[%s203 + $0x3c] sm:$0xf] %v566
        %631 = vst [vmem:[%s203 + $0x40] sm:$0xf] %v567
        %632 = vst [vmem:[%s203 + $0x44] sm:$0xf] %v568
        %633 = vst [vmem:[%s203 + $0x48] sm:$0xf] %v569
        %634 = vst [vmem:[%s203 + $0x4c] sm:$0xf] %v570
        %635 = vst [vmem:[%s203 + $0x50] sm:$0xf] %v571
        %636 = vst [vmem:[%s203 + $0x54] sm:$0xf] %v572
        %637 = vst [vmem:[%s203 + $0x58] sm:$0xf] %v573
        %638 = vst [vmem:[%s203 + $0x5c] sm:$0xf] %v574
        %639 = vst [vmem:[%s203 + $0x60] sm:$0xf] %v575
        %640 = vst [vmem:[%s203 + $0x64] sm:$0xf] %v576
        %641 = vst [vmem:[%s203 + $0x68] sm:$0xf] %v577
        %642 = vst [vmem:[%s203 + $0x6c] sm:$0xf] %v578
        %643 = vst [vmem:[%s203 + $0x70] sm:$0xf] %v579
        %644 = vst [vmem:[%s203 + $0x74] sm:$0xf] %v580
        %645 = vst [vmem:[%s203 + $0x78] sm:$0xf] %v581
        %646 = vst [vmem:[%s203 + $0x7c] sm:$0xf] %v582
        %s647 = sand.u32 %s97, 1
        %s648 = scalar_lea.sflag [#allocation4], %s647
        %s649 = sand.u32 %s97, 1
        %s650 = smul.addr %s649, 128
        %s651 = scalar_lea.vmem [#allocation7], %s650
        // Predicated region
        $region41: #{tpu_custom_call.1} parent=31 // pred_check
          %p652 = pneg %p107
        $region42: #{tpu_custom_call.1} parent=31 // pred_check_branch
          %654 = sbr.rel (%p652) target = $region44
        $region43: #{tpu_custom_call.1} parent=31 // pred_region
          %s655 = smul.u32 32, %s21
          %s657 = ssub.s32 2048, 2048
          %658 = vsyncadd %s648, %s657
          %s659 = smul.addr %s655, 64
          %s660 = scalar_lea.hbm %s3, %s659
          %s661 = sshll.u32 %s651, 4
          %s662 = int_to_ptr.vmem [resolvable:$true] %s661
          %667 = dma.vmem_to_hbm [thread:$0]  %s662, 2048, %s660, %s648, 64, 64, 4
        $region44: #{tpu_custom_call.1} parent=31 // pred_fallthru
          _
      $region32: #{tpu_custom_call.1} parent=5 // pred_fallthru
        _
      %p668 = scmp.le.s32.totalorder 2, %s16
      // Predicated region
      $region45: #{tpu_custom_call.1} parent=5 // pred_check
        %p669 = pneg %p668
      $region46: #{tpu_custom_call.1} parent=5 // pred_check_branch
        %671 = sbr.rel (%p669) target = $region48
      $region47: #{tpu_custom_call.1} parent=5 // pred_region
        %s672 = ssub.s32 %s16, 2
        // Predicated region
        $region49: #{tpu_custom_call.1} parent=47 // pred_check
          %p673 = pneg %p113
        $region50: #{tpu_custom_call.1} parent=47 // pred_check_branch
          %675 = sbr.rel (%p673) target = $region52
        $region51: #{tpu_custom_call.1} parent=47 // pred_region
          %s676 = sand.u32 %s98, 1
          %s677 = scalar_lea.sflag [#allocation4], %s676
          %s678 = sand.u32 %s98, 1
          %s679 = smul.addr %s678, 128
          %s680 = scalar_lea.vmem [#allocation7], %s679
          %681 = dma.done %s677, 2048
        $region52: #{tpu_custom_call.1} parent=47 // pred_fallthru
          _
      $region48: #{tpu_custom_call.1} parent=5 // pred_fallthru
        _
    $region6: #{tpu_custom_call.1} parent=1 // loop_footer
      %s20 = sadd.s32 1, %s16
    $region7: #{tpu_custom_call.1} parent=1 // loop_footer_branch
      %15 = sbr.rel target = $region3
    $region8: #{tpu_custom_call.1} parent=1 // loop_exit
      _
    %682 = vsyncpa [#allocation3], 1
    %s683 = scalar_lea.sflag [#allocation3], 1
    %684 = vsyncpa %s683, 1
    %685 = vsyncpa [#allocation6], 1
    %686 = vsyncpa [#allocation4], 1
    %s687 = scalar_lea.sflag [#allocation4], 1
    %688 = vsyncpa %s687, 1

</llo_original>
